<compile_context>
chip_gen: v7x
topology: tpu7x:2x2x1
jax: 0.10.0
libtpu: 0.0.40
codegen_flags: <defaults>
</compile_context>

<pallas_src>
import jax
import jax.numpy as jnp
from jax.experimental import pallas as pl
from jax.experimental.pallas import tpu as pltpu


def scalar_kernel(x_ref, w1_ref, b1_ref, w2_ref, b2_ref, o_ref, acc_ref):
    k = pl.program_id(1)

    @pl.when(k == 0)
    def _():
        acc_ref[...] = jnp.zeros_like(acc_ref)

    # First projection on the MXU: (bm, tk) @ (tk, Hh), f32 accumulation.
    acc_ref[...] += jnp.dot(x_ref[...], w1_ref[...],
                            preferred_element_type=jnp.float32)

    @pl.when(k == pl.num_programs(1) - 1)
    def _():
        h = acc_ref[...] + b1_ref[...]            # (bm, Hh) + (1, Hh), f32
        h = h * jax.nn.sigmoid(h)                 # SiLU on VPU/EUP, f32
        # Second projection as VPU multiply + lane reduce:
        # (bm, Hh) * (1, Hh) -> sum over lanes -> (bm, 1).
        col = jnp.sum(h * w2_ref[...], axis=-1, keepdims=True)
        col = col + b2_ref[0, 0]                  # scalar bias from SMEM
        # Lane-dense store: (bm, 1) column -> (1, bm) row (XLU has slack here).
        o_ref[...] = jnp.transpose(col, (1, 0)).astype(o_ref.dtype)


def _round_up(v, m):
    return ((v + m - 1) // m) * m


def _choose_tk(H, Hh, itemsize, budget=8 << 20):
    """K-tile for streaming w1. Must divide H exactly (no ragged K edge)."""
    if 2 * H * Hh * itemsize <= budget:
        return H                                  # w1 effectively resident
    for tk in (4096, 2048, 1024, 512, 256, 128):  # multiples of 128 (x lane dim)
        if H % tk == 0 and 2 * tk * Hh * itemsize <= budget:
            return tk
    for tk in (128, 256, 512, 1024, 2048, 4096):
        if H % tk == 0:
            return tk
    return H                                      # awkward H: keep w1 resident


def _choose_bm(N, tk, Hh, x_itemsize):
    """Row tile: keep x tile / accumulator in budget, >=2 tiles for megacore."""
    if N <= 16:
        return N                                  # single full-extent block
    bm = min((8 << 20) // max(1, 2 * tk * x_itemsize),  # 2x-buffered x tile
             (8 << 20) // max(1, Hh * 4),                # f32 accumulator
             2048)
    if N >= 256:
        bm = min(bm, pl.cdiv(N, 2))               # >=2 row tiles (v7x megacore)
    bm = max(16, _round_up(bm, 16))               # bf16 sublane packing
    bm = min(bm, _round_up(N, 16))
    return bm


def scalar_forward(x, w1, b1, w2, b2, *, use_bf16=True):
    """x: (N, H); w1: (H, H/2); b1: (H/2,) or (1, H/2); w2: (H/2, 1); b2: (1,).

    Weights are the PyTorch nn.Linear parameters pre-transposed to (in, out).
    """
    N, H = x.shape
    Hh = w1.shape[1]
    out_dtype = x.dtype

    mxu_dtype = jnp.bfloat16 if use_bf16 else x.dtype
    x_in = x.astype(mxu_dtype)
    w1_in = w1.astype(mxu_dtype)
    b1_in = jnp.reshape(b1, (1, Hh)).astype(jnp.float32)
    w2_row = jnp.reshape(w2, (1, Hh)).astype(jnp.float32)   # lane-major row
    b2_s = jnp.reshape(b2, (1, 1)).astype(jnp.float32)      # scalar -> SMEM

    itemsize = jnp.dtype(mxu_dtype).itemsize
    tk = _choose_tk(H, Hh, itemsize)
    bm = _choose_bm(N, tk, Hh, itemsize)
    n_tiles = pl.cdiv(N, bm)
    n_k = H // tk

    # Explicit VMEM budget with headroom (v7x has 64 MiB total; stay <=48 MiB).
    est = (2 * bm * tk * itemsize            # double-buffered x tile
           + 2 * tk * Hh * itemsize          # double-buffered w1 tile
           + bm * Hh * 4                     # f32 accumulator scratch
           + 2 * bm * jnp.dtype(out_dtype).itemsize
           + (1 << 20))
    vmem_limit = int(min(max(2 * est, 32 << 20), 48 << 20))

    out = pl.pallas_call(
        scalar_kernel,
        out_shape=jax.ShapeDtypeStruct((n_tiles, bm), out_dtype),
        grid_spec=pltpu.PrefetchScalarGridSpec(
            num_scalar_prefetch=0,
            grid=(n_tiles, n_k),
            in_specs=[
                # x: streamed (bm, tk) tiles (double-buffered by the pipeline).
                pl.BlockSpec((bm, tk), lambda i, k: (i, k)),
                # w1: streamed along K; constant over row tiles.
                pl.BlockSpec((tk, Hh), lambda i, k: (k, 0)),
                # Small biases / second-layer weight row: VMEM-resident.
                pl.BlockSpec((1, Hh), lambda i, k: (0, 0)),
                pl.BlockSpec((1, Hh), lambda i, k: (0, 0)),
                # b2: scalar in SMEM (no padded VMEM tile / DMA for a 1x1).
                pl.BlockSpec(memory_space=pltpu.MemorySpace.SMEM),
            ],
            # Lane-dense output: one (1, bm) row per row tile.
            out_specs=pl.BlockSpec((1, bm), lambda i, k: (i, 0)),
            scratch_shapes=[pltpu.VMEM((bm, Hh), jnp.float32)],
        ),
        compiler_params=pltpu.CompilerParams(
            # Row tiles independent -> megacore; K is a reduction -> arbitrary.
            dimension_semantics=("parallel", "arbitrary"),
            vmem_limit_bytes=vmem_limit,
        ),
    )(x_in, w1_in, b1_in, w2_row, b2_s)

    # (n_tiles, bm) lane-dense rows -> (N, 1) column; drop ragged garbage rows.
    return out.reshape(n_tiles * bm, 1)[:N]


def xavier_uniform(key, fan_in, fan_out, dtype=jnp.float32):
    # Matches torch.nn.init.xavier_uniform_ for a (fan_out, fan_in) weight;
    # generated directly in (fan_in, fan_out) layout (same distribution).
    bound = (6.0 / (fan_in + fan_out)) ** 0.5
    return jax.random.uniform(key, (fan_in, fan_out), dtype,
                              minval=-bound, maxval=bound)


def _reference(x, w1, b1, w2, b2):
    h = x @ w1 + jnp.reshape(b1, (1, -1))
    h = h * jax.nn.sigmoid(h)
    return h @ w2 + jnp.reshape(b2, (1, 1))


if __name__ == "__main__":
    hidden_channels = 32   # H
    N = 8                  # number of samples (rows)

    key = jax.random.PRNGKey(0)
    kx, kw1, kw2, kx2 = jax.random.split(key, 4)

    # Deterministic parameters (mirrors reset_parameters: xavier weights, zero biases).
    w1 = xavier_uniform(kw1, hidden_channels, hidden_channels // 2)   # (H, H/2)
    b1 = jnp.zeros((hidden_channels // 2,), dtype=jnp.float32)
    w2 = xavier_uniform(kw2, hidden_channels // 2, 1)                 # (H/2, 1)
    b2 = jnp.zeros((1,), dtype=jnp.float32)

    x = jax.random.normal(kx, (N, hidden_channels), dtype=jnp.float32)
    ref = _reference(x, w1, b1, w2, b2)

    # Tight check with f32 MXU operands (exact structural correctness).
    out_f32 = jax.block_until_ready(scalar_forward(x, w1, b1, w2, b2,
                                                   use_bf16=False))
    assert out_f32.shape == (N, 1)
    assert jnp.allclose(out_f32, ref, atol=1e-5, rtol=1e-5)

    # Default bf16-MXU path: looser tolerance vs the f32 reference.
    out_bf = jax.block_until_ready(scalar_forward(x, w1, b1, w2, b2))
    assert out_bf.shape == (N, 1)
    assert jnp.allclose(out_bf, ref, atol=5e-2, rtol=5e-2)

    # Secondary check exercising a multi-tile grid with a ragged last row tile
    # (no wrapper-side padding).
    N2 = 300
    x2 = jax.random.normal(kx2, (N2, hidden_channels), dtype=jnp.float32)
    out2 = jax.block_until_ready(scalar_forward(x2, w1, b1, w2, b2))
    ref2 = _reference(x2, w1, b1, w2, b2)
    assert out2.shape == (N2, 1)
    assert jnp.allclose(out2, ref2, atol=5e-2, rtol=5e-2)

    print("KERNEL_OK")
</pallas_src>

<mosaic_0001>
module attributes {stable_mosaic.version = 11 : i64} {
  func.func @scalar_kernel(%arg0: i32, %arg1: i32, %arg2: memref<8x32xf32, #tpu.memory_space<vmem>>, %arg3: memref<32x16xf32, #tpu.memory_space<vmem>>, %arg4: memref<1x16xf32, #tpu.memory_space<vmem>>, %arg5: memref<1x16xf32, #tpu.memory_space<vmem>>, %arg6: memref<1x1xf32, #tpu.memory_space<smem>>, %arg7: memref<1x8xf32, #tpu.memory_space<vmem>>, %arg8: memref<8x16xf32, #tpu.memory_space<vmem>>) attributes {dimension_semantics = [#tpu.dimension_semantics<parallel>, #tpu.dimension_semantics<arbitrary>], iteration_bounds = array<i64: 1, 1>, scalar_prefetch = 0 : i64, scratch_operands = 1 : i64, tpu.core_type = #tpu.core_type<tc>, window_params = [{transform_indices = @transform_0, window_bounds = array<i64: 8, 32>}, {transform_indices = @transform_1, window_bounds = array<i64: 32, 16>}, {pipeline_mode = #tpu.pipeline_mode<synchronous>, transform_indices = @transform_2, window_bounds = array<i64: 1, 16>}, {pipeline_mode = #tpu.pipeline_mode<synchronous>, transform_indices = @transform_3, window_bounds = array<i64: 1, 16>}, {transform_indices = @transform_4, window_bounds = array<i64: 1, 1>}, {transform_indices = @transform_5, window_bounds = array<i64: 1, 8>}]} {
    %c0_i32 = arith.constant 0 : i32
    %0 = arith.cmpi eq, %arg1, %c0_i32 : i32
    %1 = arith.extui %0 : i1 to i32
    %c0_i32_0 = arith.constant 0 : i32
    %2 = arith.cmpi ne, %1, %c0_i32_0 : i32
    scf.if %2 {
      %cst_10 = arith.constant 0.000000e+00 : f32
      %12 = vector.broadcast %cst_10 : f32 to vector<8x16xf32>
      %c0_11 = arith.constant 0 : index
      %c0_12 = arith.constant 0 : index
      %13 = vector.load %arg8[%c0_11, %c0_12] : memref<8x16xf32, #tpu.memory_space<vmem>>, vector<8x16xf32>
      tpu.vector_store %arg8[%c0_11, %c0_12], %12 {strides = array<i32>} : memref<8x16xf32, #tpu.memory_space<vmem>>, vector<8x16xf32>,
    } else {
    }
    %c0 = arith.constant 0 : index
    %c0_1 = arith.constant 0 : index
    %3 = vector.load %arg8[%c0, %c0_1] : memref<8x16xf32, #tpu.memory_space<vmem>>, vector<8x16xf32>
    %c0_2 = arith.constant 0 : index
    %c0_3 = arith.constant 0 : index
    %4 = vector.load %arg2[%c0_2, %c0_3] : memref<8x32xf32, #tpu.memory_space<vmem>>, vector<8x32xf32>
    %c0_4 = arith.constant 0 : index
    %c0_5 = arith.constant 0 : index
    %5 = vector.load %arg3[%c0_4, %c0_5] : memref<32x16xf32, #tpu.memory_space<vmem>>, vector<32x16xf32>
    %cst = arith.constant dense<0.000000e+00> : vector<8x16xf32>
    %6 = tpu.matmul %4, %5, %cst {dimension_numbers = #tpu.dot_dimension_numbers<[1], [0], [0], [1], [0, 0, 1, 1], [], []>} : vector<8x32xf32>, vector<32x16xf32>, vector<8x16xf32> -> vector<8x16xf32>
    %7 = arith.addf %3, %6 : vector<8x16xf32>
    %c0_6 = arith.constant 0 : index
    %c0_7 = arith.constant 0 : index
    %8 = vector.load %arg8[%c0_6, %c0_7] : memref<8x16xf32, #tpu.memory_space<vmem>>, vector<8x16xf32>
    tpu.vector_store %arg8[%c0_6, %c0_7], %7 {strides = array<i32>} : memref<8x16xf32, #tpu.memory_space<vmem>>, vector<8x16xf32>,
    %c0_i32_8 = arith.constant 0 : i32
    %9 = arith.cmpi eq, %arg1, %c0_i32_8 : i32
    %10 = arith.extui %9 : i1 to i32
    %c0_i32_9 = arith.constant 0 : i32
    %11 = arith.cmpi ne, %10, %c0_i32_9 : i32
    scf.if %11 {
      %c0_10 = arith.constant 0 : index
      %c0_11 = arith.constant 0 : index
      %12 = vector.load %arg8[%c0_10, %c0_11] : memref<8x16xf32, #tpu.memory_space<vmem>>, vector<8x16xf32>
      %c0_12 = arith.constant 0 : index
      %c0_13 = arith.constant 0 : index
      %13 = vector.load %arg4[%c0_12, %c0_13] : memref<1x16xf32, #tpu.memory_space<vmem>>, vector<1x16xf32>
      %14 = vector.broadcast %13 : vector<1x16xf32> to vector<8x16xf32>
      %15 = arith.addf %12, %14 : vector<8x16xf32>
      %16 = arith.negf %15 : vector<8x16xf32>
      %17 = math.exp %16 : vector<8x16xf32>
      %cst_14 = arith.constant 1.000000e+00 : f32
      %18 = vector.broadcast %cst_14 : f32 to vector<8x16xf32>
      %19 = arith.addf %18, %17 : vector<8x16xf32>
      %20 = arith.divf %18, %19 : vector<8x16xf32>
      %21 = arith.mulf %15, %20 : vector<8x16xf32>
      %c0_15 = arith.constant 0 : index
      %c0_16 = arith.constant 0 : index
      %22 = vector.load %arg5[%c0_15, %c0_16] : memref<1x16xf32, #tpu.memory_space<vmem>>, vector<1x16xf32>
      %23 = vector.broadcast %22 : vector<1x16xf32> to vector<8x16xf32>
      %24 = arith.mulf %21, %23 : vector<8x16xf32>
      %cst_17 = arith.constant dense<0.000000e+00> : vector<8xf32>
      %25 = vector.multi_reduction <add>, %24, %cst_17 [1] : vector<8x16xf32> to vector<8xf32>
      %26 = vector.shape_cast %25 : vector<8xf32> to vector<8x1xf32>
      %c0_18 = arith.constant 0 : index
      %c0_19 = arith.constant 0 : index
      %27 = memref.load %arg6[%c0_18, %c0_19] : memref<1x1xf32, #tpu.memory_space<smem>>
      %28 = vector.broadcast %27 : f32 to vector<8x1xf32>
      %29 = arith.addf %26, %28 : vector<8x1xf32>
      %30 = tpu.transpose %29, [1, 0] : vector<8x1xf32> -> vector<1x8xf32>
      %c0_20 = arith.constant 0 : index
      %c0_21 = arith.constant 0 : index
      %31 = vector.load %arg7[%c0_20, %c0_21] : memref<1x8xf32, #tpu.memory_space<vmem>>, vector<1x8xf32>
      tpu.vector_store %arg7[%c0_20, %c0_21], %30 {strides = array<i32>} : memref<1x8xf32, #tpu.memory_space<vmem>>, vector<1x8xf32>,
    } else {
    }
    return
  }
  func.func @transform_0(%arg0: i32, %arg1: i32) -> (i32, i32) {
    %c0_i32 = arith.constant 0 : i32
    return %arg0, %arg1 : i32, i32
  }
  func.func @transform_1(%arg0: i32, %arg1: i32) -> (i32, i32) {
    %c0_i32 = arith.constant 0 : i32
    %c0_i32_0 = arith.constant 0 : i32
    return %arg1, %c0_i32 : i32, i32
  }
  func.func @transform_2(%arg0: i32, %arg1: i32) -> (i32, i32) {
    %c0_i32 = arith.constant 0 : i32
    %c0_i32_0 = arith.constant 0 : i32
    %c0_i32_1 = arith.constant 0 : i32
    return %c0_i32, %c0_i32_0 : i32, i32
  }
  func.func @transform_3(%arg0: i32, %arg1: i32) -> (i32, i32) {
    %c0_i32 = arith.constant 0 : i32
    %c0_i32_0 = arith.constant 0 : i32
    %c0_i32_1 = arith.constant 0 : i32
    return %c0_i32, %c0_i32_0 : i32, i32
  }
  func.func @transform_4(%arg0: i32, %arg1: i32) -> (i32, i32) {
    %c0_i32 = arith.constant 0 : i32
    %c0_i32_0 = arith.constant 0 : i32
    %c0_i32_1 = arith.constant 0 : i32
    return %c0_i32, %c0_i32_0 : i32, i32
  }
  func.func @transform_5(%arg0: i32, %arg1: i32) -> (i32, i32) {
    %c0_i32 = arith.constant 0 : i32
    %c0_i32_0 = arith.constant 0 : i32
    return %arg0, %c0_i32 : i32, i32
  }
}

</mosaic_0001>

<llo_original>
// kernel: tpu_custom_call.1
$region0: #{tpu_custom_call.1}
  #allocation0 [shape = 'u32[]', space=smem, size = 0x4, offset = 0x4, fixed_abs, tag = 'smem constant byte address 0x4 - core index']
  #allocation1 [shape = 'u32[144,128]{1,0:T(1,128)}', space=vmem, size = 0x12000, scoped, tag = 'internal scratch']
  #allocation2 [shape = 'f32[8,16]{1,0:T(8,128)}', space=vmem, size = 0x1000, scoped, tag = 'scratch operand']
  #allocation3 [shape = 'f32[1,1]{1,0:T(1,128)S(6)}', space=smem, size = 0x200, scoped, tag = 'scoped memory for tpu_custom_call.1']
  %s0 = inlined_call_operand.vmem [shape: f32[8,32], index: 0, kind: input, shape index: {}]
  %s1 = inlined_call_operand.vmem [shape: f32[32,16], index: 1, kind: input, shape index: {}]
  %s2 = inlined_call_operand.vmem [shape: f32[1,16], index: 2, kind: input, shape index: {}]
  %s3 = inlined_call_operand.vmem [shape: f32[1,16], index: 3, kind: input, shape index: {}]
  %s4 = inlined_call_operand.<no memory space> [shape: f32[1,1], index: 4, kind: input, shape index: {}]
  %s5 = inlined_call_operand.hbm [shape: f32[1,8], index: 5, kind: output, shape index: {}]
  %s6 = sld [smem:[#allocation0]]
  $region38: #{tpu_custom_call.1} parent=0
    _
  %s8 = ssub.s32 1, %s6
  %s9 = scalar_select 0, %s8, %s6
  %10 = sst [smem:[#allocation3]] %s4
  $region1: #{tpu_custom_call.1} parent=0
    #allocation4 [shape = 'u8[512]{0}', space=vmem, size = 0x400, scoped, tag = 'output window, operand 0, single buffered']
    #allocation5 [shape = 's32[1]{0}', space=sflag, size = 0x4, scoped, tag = 'scoped memory for tpu_custom_call.1']
    %11 = vsyncpa [#allocation5], 0
    // Predicated region
    $region2: #{tpu_custom_call.1} parent=1 // pred_check
      _
    $region3: #{tpu_custom_call.1} parent=1 // pred_check_branch
      %13 = sbr.rel (0) target = $region5
    $region4: #{tpu_custom_call.1} parent=1 // pred_region
      _
    $region5: #{tpu_custom_call.1} parent=1 // pred_fallthru
      _
    // Predicated region
    $region6: #{tpu_custom_call.1} parent=1 // pred_check
      _
    $region7: #{tpu_custom_call.1} parent=1 // pred_check_branch
      %15 = sbr.rel (0) target = $region9
    $region8: #{tpu_custom_call.1} parent=1 // pred_region
      _
    $region9: #{tpu_custom_call.1} parent=1 // pred_fallthru
      _
    // Predicated region
    $region10: #{tpu_custom_call.1} parent=1 // pred_check
      _
    $region11: #{tpu_custom_call.1} parent=1 // pred_check_branch
      %17 = sbr.rel (0) target = $region13
    $region12: #{tpu_custom_call.1} parent=1 // pred_region
      _
    $region13: #{tpu_custom_call.1} parent=1 // pred_fallthru
      _
    // Predicated region
    $region14: #{tpu_custom_call.1} parent=1 // pred_check
      _
    $region15: #{tpu_custom_call.1} parent=1 // pred_check_branch
      %19 = sbr.rel (0) target = $region17
    $region16: #{tpu_custom_call.1} parent=1 // pred_region
      _
    $region17: #{tpu_custom_call.1} parent=1 // pred_fallthru
      _
    // Predicated region
    $region18: #{tpu_custom_call.1} parent=1 // pred_check
      _
    $region19: #{tpu_custom_call.1} parent=1 // pred_check_branch
      %21 = sbr.rel (0) target = $region21
    $region20: #{tpu_custom_call.1} parent=1 // pred_region
      _
    $region21: #{tpu_custom_call.1} parent=1 // pred_fallthru
      _
    %p22 = scmp.eq.s32.totalorder 0, 0
    // Predicated region
    $region22: #{tpu_custom_call.1} parent=1 // pred_check
      %p23 = pneg %p22
    $region23: #{tpu_custom_call.1} parent=1 // pred_check_branch
      %25 = sbr.rel (%p23) target = $region25
    $region24: #{tpu_custom_call.1} parent=1 // pred_region
      %vm26 = vcmask 130048
      %27 = vst.msk [vmem:[#allocation2] sm:$0xff] %vm26, 0.0
    $region25: #{tpu_custom_call.1} parent=1 // pred_fallthru
      _
    %v28 = vld [vmem:[#allocation2] sm:$0xff]
    %v29 = vld [vmem:[%s0] sm:$0xff]
    %v30 = vld [vmem:[%s1] sm:$0xff]
    %v31 = vld [vmem:[%s1 + $0x8] sm:$0xff]
    %v32 = vld [vmem:[%s1 + $0x10] sm:$0xff]
    %v33 = vld [vmem:[%s1 + $0x18] sm:$0xff]
    %vm34 = vcmask 261120
    %v36 = vsel %vm34, %v29, 0
    %38 = vmatprep.subr.mxu0 0.0
    %39 = vmatpush1.msra.mxu0 %v30
    %40 = vmatprep.subr.mxu0 0.0
    %41 = vmatpush1.msra.mxu0 %v31
    %42 = vmatprep.subr.mxu0 0.0
    %43 = vmatpush1.msra.mxu0 %v32
    %44 = vmatprep.subr.mxu0 0.0
    %45 = vmatpush1.msra.mxu0 %v33
    %46 = vmatprep.subr.mxu0 0.0
    %47 = vmatpush1.msra.mxu0 0.0
    %48 = vmatprep.subr.mxu0 0.0
    %49 = vmatpush1.msra.mxu0 0.0
    %50 = vmatprep.subr.mxu0 0.0
    %51 = vmatpush1.msra.mxu0 0.0
    %52 = vmatprep.subr.mxu0 0.0
    %53 = vmatpush1.msra.mxu0 0.0
    %54 = vmatprep.subr.mxu0 0.0
    %55 = vmatpush1.msra.mxu0 0.0
    %56 = vmatprep.subr.mxu0 0.0
    %57 = vmatpush1.msra.mxu0 0.0
    %58 = vmatprep.subr.mxu0 0.0
    %59 = vmatpush1.msra.mxu0 0.0
    %60 = vmatprep.subr.mxu0 0.0
    %61 = vmatpush1.msra.mxu0 0.0
    %62 = vmatprep.subr.mxu0 0.0
    %63 = vmatpush1.msra.mxu0 0.0
    %64 = vmatprep.subr.mxu0 0.0
    %65 = vmatpush1.msra.mxu0 0.0
    %66 = vmatprep.subr.mxu0 0.0
    %67 = vmatpush1.msra.mxu0 0.0
    %68 = vmatprep.subr.mxu0 0.0
    %69 = vmatpush1.msra.mxu0 0.0
    %70 = vmatprep.subr.mxu0 0.0
    %71 = vmatpush1.msra.mxu0 0.0
    %72 = vmatprep.subr.mxu0 0.0
    %73 = vmatpush1.msra.mxu0 0.0
    %74 = vmatprep.subr.mxu0 0.0
    %75 = vmatpush1.msra.mxu0 0.0
    %76 = vmatprep.subr.mxu0 0.0
    %77 = vmatpush1.msra.mxu0 0.0
    %78 = vmatprep.subr.mxu0 0.0
    %79 = vmatpush1.msra.mxu0 0.0
    %80 = vmatprep.subr.mxu0 0.0
    %81 = vmatpush1.msra.mxu0 0.0
    %82 = vmatprep.subr.mxu0 0.0
    %83 = vmatpush1.msra.mxu0 0.0
    %84 = vmatprep.subr.mxu0 0.0
    %85 = vmatpush1.msra.mxu0 0.0
    %86 = vmatprep.subr.mxu0 0.0
    %87 = vmatpush1.msra.mxu0 0.0
    %88 = vmatprep.subr.mxu0 0.0
    %89 = vmatpush1.msra.mxu0 0.0
    %90 = vmatprep.subr.mxu0 0.0
    %91 = vmatpush1.msra.mxu0 0.0
    %92 = vmatprep.subr.mxu0 0.0
    %93 = vmatpush1.msra.mxu0 0.0
    %94 = vmatprep.subr.mxu0 0.0
    %95 = vmatpush1.msra.mxu0 0.0
    %96 = vmatprep.subr.mxu0 0.0
    %97 = vmatpush1.msra.mxu0 0.0
    %98 = vmatprep.subr.mxu0 0.0
    %99 = vmatpush1.msra.mxu0 0.0
    %100 = vmatprep.subr.mxu0 0.0
    %101 = vmatpush1.msra.mxu0 0.0
    %102 = vmatprep.mubr.f32.mxu0 0.0
    %103 = vmatmul.mubr.f32.gmra.mrb[0].mxu0 %v36
    %v104 = vpop.f32.mrb[0].mxu0
    %v105 = vadd.f32 0.0, %v104
    %v106 = vpop.f32.mrb[0].mxu0
    %107 = vdwg.mxu0
    %v108 = vadd.f32 %v28, %v105
    %vm109 = vcmask 130048
    %110 = vst.msk [vmem:[#allocation2] sm:$0xff] %vm109, %v108
    // Predicated region
    $region26: #{tpu_custom_call.1} parent=1 // pred_check
      %p111 = pneg %p22
    $region27: #{tpu_custom_call.1} parent=1 // pred_check_branch
      %113 = sbr.rel (%p111) target = $region29
    $region28: #{tpu_custom_call.1} parent=1 // pred_region
      %v114 = vld [vmem:[#allocation2] sm:$0xff]
      %v115 = vld [vmem:[%s2] sm:$0x1]
      %v117 = vlaneseq
      %v118 = vshrl.u32 %v117, 7
      %v119 = vsub.s32 0, %v118
      %v120 = vrot.slane %v115, %v119
      %v122 = vadd.f32 %v114, %v120
      %v123 = vxor.u32 %v122, 2147483648
      %v124 = vmul.f32 %v123, 1.442695
      %v125 = vpow.pop %v124
      %v126 = vadd.f32 %v125, 1.0
      %v127 = vrcp.pop %v126
      %v128 = vmul.f32 1.0, %v127
      %v129 = vmul.f32 %v122, %v128
      %v130 = vld [vmem:[%s3] sm:$0x1]
      %v132 = vlaneseq
      %v133 = vshrl.u32 %v132, 7
      %v134 = vsub.s32 0, %v133
      %v135 = vrot.slane %v130, %v134
      %v137 = vmul.f32 %v129, %v135
      %v138 = vsel %vm109, %v137, 0.0
      %139 = vadd.xlane.f32.xlu0 %v138
      %v140 = vpop.xlane.xlu0 %139
      %s141 = sld [smem:[#allocation3]]
      %v142 = vstv %s141
      %v143 = vadd.f32 %v140, %v142
      %144 = vxpose.xlu0.b32.start [1/16] %v143, 128
      %145 = vxpose.xlu0.b32.cont [2/16] 0.0, 128
      %146 = vxpose.xlu0.b32.cont [3/16] 0.0, 128
      %147 = vxpose.xlu0.b32.cont [4/16] 0.0, 128
      %148 = vxpose.xlu0.b32.cont [5/16] 0.0, 128
      %149 = vxpose.xlu0.b32.cont [6/16] 0.0, 128
      %150 = vxpose.xlu0.b32.cont [7/16] 0.0, 128
      %151 = vxpose.xlu0.b32.cont [8/16] 0.0, 128
      %152 = vxpose.xlu0.b32.cont [9/16] 0.0, 128
      %153 = vxpose.xlu0.b32.cont [10/16] 0.0, 128
      %154 = vxpose.xlu0.b32.cont [11/16] 0.0, 128
      %155 = vxpose.xlu0.b32.cont [12/16] 0.0, 128
      %156 = vxpose.xlu0.b32.cont [13/16] 0.0, 128
      %157 = vxpose.xlu0.b32.cont [14/16] 0.0, 128
      %158 = vxpose.xlu0.b32.cont [15/16] 0.0, 128
      %159 = vxpose.xlu0.b32.end [16/16] 0.0, 128
      %v160 = vpop.trf.xlu0
      %v161 = vpop.trf.xlu0
      %v162 = vpop.trf.xlu0
      %v163 = vpop.trf.xlu0
      %v164 = vpop.trf.xlu0
      %v165 = vpop.trf.xlu0
      %v166 = vpop.trf.xlu0
      %v167 = vpop.trf.xlu0
      %v168 = vpop.trf.xlu0
      %v169 = vpop.trf.xlu0
      %v170 = vpop.trf.xlu0
      %v171 = vpop.trf.xlu0
      %v172 = vpop.trf.xlu0
      %v173 = vpop.trf.xlu0
      %v174 = vpop.trf.xlu0
      %v175 = vpop.trf.xlu0
      %vm176 = vcmask 57344
      %177 = vst.msk [vmem:[#allocation4] sm:$0x1] %vm176, %v160
    $region29: #{tpu_custom_call.1} parent=1 // pred_fallthru
      _
    // Predicated region
    $region30: #{tpu_custom_call.1} parent=1 // pred_check
      _
    $region31: #{tpu_custom_call.1} parent=1 // pred_check_branch
      %179 = sbr.rel (0) target = $region33
    $region32: #{tpu_custom_call.1} parent=1 // pred_region
      %s181 = ssub.s32 16, 16
      %182 = vsyncadd [#allocation5], %s181
      %s184 = sshll.u32 [#allocation4], 4
      %s185 = int_to_ptr.vmem [resolvable:$true] %s184
      %187 = dma.vmem_to_hbm [thread:$0]  %s185, 16, %s5, [#allocation5]
    $region33: #{tpu_custom_call.1} parent=1 // pred_fallthru
      _
    // Predicated region
    $region34: #{tpu_custom_call.1} parent=1 // pred_check
      _
    $region35: #{tpu_custom_call.1} parent=1 // pred_check_branch
      %189 = sbr.rel (0) target = $region37
    $region36: #{tpu_custom_call.1} parent=1 // pred_region
      %190 = dma.done [#allocation5], 16
    $region37: #{tpu_custom_call.1} parent=1 // pred_fallthru
      _
    %191 = vsyncpa [#allocation5], 1

</llo_original>
